<compile_context>
chip_gen: v7x
topology: tpu7x:2x2x1
jax: 0.10.0
libtpu: 0.0.40
codegen_flags: <defaults>
</compile_context>

<pallas_src>
import functools

import jax
import jax.numpy as jnp
from jax import lax
from jax.experimental import pallas as pl
from jax.experimental.pallas import tpu as pltpu

_N_REG = 3  # channels [:3] are regression, [3:] are classification logits


def _smart_home_loss_kernel(fan_ref, fan_t_ref, light_ref, light_t_ref,
                            rec_ref, rec_t_ref, out_ref,
                            acc_reg_ref, acc_ce_ref, acc_cecol_ref, fl_ref, *,
                            num_channels):
    """One (split, batch-tile) step of the fused SmartHomeLoss reduction.

    rec/rec_t blocks are (tb, W) with W = S*C in the native row-major layout
    (lane j = s*C + c).  Partial numerators are accumulated lane-wise in VMEM
    and written per split to out_ref (SMEM, row [fan, light, reg, ce]).
    """
    C = num_channels
    split = pl.program_id(0)
    step = pl.program_id(1)
    last = pl.num_programs(1) - 1

    # ---- init (per split): accumulators + fan/light L1 numerators ----------
    @pl.when(step == 0)
    def _init():
        acc_reg_ref[...] = jnp.zeros_like(acc_reg_ref)
        acc_ce_ref[...] = jnp.zeros_like(acc_ce_ref)
        acc_cecol_ref[...] = jnp.zeros_like(acc_cecol_ref)
        fan_d = jnp.sum(jnp.abs(fan_ref[...].astype(jnp.float32)
                                - fan_t_ref[...].astype(jnp.float32)))
        light_d = jnp.sum(jnp.abs(light_ref[...].astype(jnp.float32)
                                  - light_t_ref[...].astype(jnp.float32)))
        only0 = split == 0  # only split 0 contributes the fan/light sums
        fl_ref[0] = jnp.where(only0, fan_d, 0.0)
        fl_ref[1] = jnp.where(only0, light_d, 0.0)

    x = rec_ref[...].astype(jnp.float32)    # (tb, W) predictions
    t = rec_t_ref[...].astype(jnp.float32)  # (tb, W) targets
    tb, W = x.shape

    # Channel id per lane.  The block always spans the full S*C lane extent
    # (only the batch axis is tiled), so the local lane index is global.
    ch = lax.broadcasted_iota(jnp.int32, (1, W), 1) % C
    is_reg = ch < _N_REG
    is_cls = ch >= _N_REG

    # ---- regression L1 numerator (lane-dense, lane-wise accumulation) ------
    reg_vec = jnp.sum(jnp.where(is_reg, jnp.abs(x - t), 0.0),
                      axis=0, keepdims=True)                       # (1, W)

    # ---- soft-target cross entropy over S -----------------------------------
    #   -sum_s t*log_softmax(x) = sum_s t*(m + log(sum_s' exp(x-m)) - x),
    # an exact identity for ANY stabilizer m.  We use the per-row max so no
    # cross-lane-strided max is needed; the exp argument stays <= 0.  The
    # per-(b,c) sums over S run on the MXU via a 0/1 channel one-hot matrix.
    m_row = jnp.max(x, axis=1, keepdims=True)                      # (tb, 1)
    e = jnp.exp(x - m_row)                                         # (tb, W)

    a_mat = (lax.broadcasted_iota(jnp.int32, (W, C), 0) % C
             == lax.broadcasted_iota(jnp.int32, (W, C), 1)
             ).astype(jnp.float32)                                 # (W, C)
    e_sum = jnp.dot(e, a_mat, preferred_element_type=jnp.float32)  # (tb, C)
    t_sum = jnp.dot(t, a_mat, preferred_element_type=jnp.float32)  # (tb, C)
    # Guard against total underflow of a channel column (pathological logit
    # spread within one row); keeps log finite.
    log_e = jnp.log(jnp.maximum(e_sum, jnp.float32(1e-30)))        # (tb, C)

    ce_vec = jnp.sum(jnp.where(is_cls, t * (m_row - x), 0.0),
                     axis=0, keepdims=True)                        # (1, W)
    ce_col = jnp.sum(log_e * t_sum, axis=0, keepdims=True)         # (1, C)

    acc_reg_ref[...] += reg_vec
    acc_ce_ref[...] += ce_vec
    acc_cecol_ref[...] += ce_col

    # ---- finalize (per split): cross-lane reduce, write partial row --------
    @pl.when(step == last)
    def _finalize():
        cls_col = lax.broadcasted_iota(jnp.int32, (1, C), 1) >= _N_REG
        out_ref[0, 0] = fl_ref[0]
        out_ref[0, 1] = fl_ref[1]
        out_ref[0, 2] = jnp.sum(acc_reg_ref[...])
        out_ref[0, 3] = (jnp.sum(acc_ce_ref[...])
                         + jnp.sum(jnp.where(cls_col, acc_cecol_ref[...], 0.0)))


def _vmem_capacity_bytes():
    try:
        return int(pltpu.get_tpu_info().vmem_capacity_bytes)
    except Exception:
        return 64 * 1024 * 1024  # conservative (v7x-sized) fallback


def _pick_batch_tile(batch, width, f32_tile_budget_bytes):
    """Batch tile tb (tb | B, tb % 8 == 0 or tb == B) whose f32 working tile
    tb*width*4 fits the budget; prefers an even tile count for the 2-way
    TensorCore split."""
    row_bytes = width * 4
    full_bytes = batch * row_bytes
    if full_bytes <= min(f32_tile_budget_bytes, 1 << 20):
        return batch                       # tiny problem: one block, one step
    cands = [tb for tb in range(8, batch + 1, 8)
             if batch % tb == 0 and tb * row_bytes <= f32_tile_budget_bytes]
    if not cands:
        if full_bytes <= f32_tile_budget_bytes:
            return batch
        # TODO(synk): pad/mask ragged batch tiles; smallest legal tile for now.
        return 8 if batch % 8 == 0 else batch
    even = [tb for tb in cands if (batch // tb) % 2 == 0]
    return max(even) if even else max(cands)


def smart_home_loss(fan, light, reconstruction,
                    fan_target, light_target, reconstruction_target,
                    weight_fan=1.0, weight_light=1.0,
                    weight_reg_reconstruction=1.0,
                    weight_cls_reconstruction=1.0,
                    f32_tile_budget_bytes=None):
    B, S, C = reconstruction.shape
    if C <= _N_REG:
        raise ValueError("reconstruction needs more than 3 channels")
    K = C - _N_REG
    W = S * C

    vmem_cap = _vmem_capacity_bytes()
    if f32_tile_budget_bytes is None:
        # ~1/24 of VMEM per f32 working tile: ~2.7 MiB on v7x (64 MiB),
        # ~5.3 MiB on v5e/v6e (128 MiB), capped at 8 MiB.
        f32_tile_budget_bytes = min(8 << 20, max(512 << 10, vmem_cap // 24))

    # Free (bitcast) reshapes only -- no transposes, no extra HBM traffic.
    rec2 = reconstruction.reshape(B, W)
    rec_t2 = reconstruction_target.reshape(B, W)
    fan2 = fan.reshape(1, -1)
    fan_t2 = fan_target.reshape(1, -1)
    light2 = light.reshape(1, -1)
    light_t2 = light_target.reshape(1, -1)

    tb = _pick_batch_tile(B, W, f32_tile_budget_bytes)
    n_tiles = B // tb
    # 2-way split feeding both TensorCores on v7x; single-core chips run it
    # serially (no semantic difference).
    n_split = 2 if (n_tiles >= 2 and n_tiles % 2 == 0) else 1
    tiles_per_split = n_tiles // n_split

    in_itemsize = max(jnp.dtype(reconstruction.dtype).itemsize,
                      jnp.dtype(reconstruction_target.dtype).itemsize)
    blk_in = tb * W * in_itemsize
    blk_f32 = tb * W * 4
    # rec + rec_t double-buffered, f32 casts/exp/temps, one-hot matrix (lane
    # padded), small (tb,C) temps, lane-wise accumulators, slack.
    vmem_need = 4 * blk_in + 6 * blk_f32 + 2048 * W + 1024 * tb + (2 << 20)
    vmem_limit = int(min(max(vmem_need, 16 << 20),
                         max(vmem_cap - (4 << 20), 16 << 20)))

    kernel = functools.partial(_smart_home_loss_kernel, num_channels=C)

    cost = pl.CostEstimate(
        flops=int(B * W * (16 + 4 * C) + 4 * (fan2.size + light2.size)),
        transcendentals=int(B * W + B * C),
        bytes_accessed=int(2 * B * W * in_itemsize
                           + 2 * 4 * (fan2.size + light2.size)
                           + n_split * 4 * 4))

    def _const(shape):
        return pl.BlockSpec(shape, lambda c, i: (0, 0))

    rec_map = lambda c, i, _tps=tiles_per_split: (c * _tps + i, 0)

    partials = pl.pallas_call(
        kernel,
        out_shape=jax.ShapeDtypeStruct((n_split, 4), jnp.float32),
        grid=(n_split, tiles_per_split),
        in_specs=[
            _const(fan2.shape), _const(fan_t2.shape),
            _const(light2.shape), _const(light_t2.shape),
            pl.BlockSpec((tb, W), rec_map),
            pl.BlockSpec((tb, W), rec_map),
        ],
        out_specs=pl.BlockSpec((1, 4), lambda c, i: (c, 0),
                               memory_space=pltpu.MemorySpace.SMEM),
        scratch_shapes=[pltpu.VMEM((1, W), jnp.float32),   # reg accumulator
                        pltpu.VMEM((1, W), jnp.float32),   # ce lane accumulator
                        pltpu.VMEM((1, C), jnp.float32),   # ce column accumulator
                        pltpu.SMEM((2,), jnp.float32)],    # fan/light sums
        compiler_params=pltpu.CompilerParams(
            dimension_semantics=("parallel", "arbitrary"),
            vmem_limit_bytes=vmem_limit),
        cost_estimate=cost,
    )(fan2, fan_t2, light2, light_t2, rec2, rec_t2)

    # Tiny epilogue: combine the per-core partial numerators, apply means and
    # loss weights.
    sums = jnp.sum(partials, axis=0)
    fan_loss = sums[0] / jnp.float32(fan.size)
    light_loss = sums[1] / jnp.float32(light.size)
    reg_loss = sums[2] / jnp.float32(B * S * _N_REG)
    cls_loss = sums[3] / jnp.float32(B * K)
    total_loss = (weight_fan * fan_loss + weight_light * light_loss
                  + weight_reg_reconstruction * reg_loss
                  + weight_cls_reconstruction * cls_loss)
    loss_dict = {
        'fan_loss': fan_loss,
        'light_loss': light_loss,
        'reconstruction_reg_loss': reg_loss,
        'reconstruction_cls_loss': cls_loss,
        'total_loss': total_loss,
    }
    return total_loss, loss_dict


def _reference(fan, light, rec, fan_t, light_t, rec_t):
    """Pure-JAX reference mirroring the PyTorch forward."""
    l1 = lambda a, b: jnp.mean(jnp.abs(a - b))
    fan_l = l1(fan, fan_t)
    light_l = l1(light, light_t)
    reg_l = l1(rec[:, :, :_N_REG], rec_t[:, :, :_N_REG])
    logits = rec[:, :, _N_REG:]
    probs = rec_t[:, :, _N_REG:].astype(jnp.float32)
    log_sm = jax.nn.log_softmax(logits, axis=1)
    cls_l = jnp.mean(-jnp.sum(probs * log_sm, axis=1))
    total = fan_l + light_l + reg_l + cls_l
    return fan_l, light_l, reg_l, cls_l, total


def _run_case(key, B, S, C, **kwargs):
    ks = jax.random.split(key, 7)
    fan = jax.random.normal(ks[0], (B, 1), dtype=jnp.float32)
    fan_t = jax.random.normal(ks[1], (B, 1), dtype=jnp.float32)
    light = jax.random.normal(ks[2], (B, 1), dtype=jnp.float32)
    light_t = jax.random.normal(ks[3], (B, 1), dtype=jnp.float32)
    rec = jax.random.normal(ks[4], (B, S, C), dtype=jnp.float32)
    reg_t = jax.random.normal(ks[5], (B, S, _N_REG), dtype=jnp.float32)
    cls_t = jax.nn.softmax(
        jax.random.normal(ks[6], (B, S, C - _N_REG), dtype=jnp.float32), axis=1)
    rec_t = jnp.concatenate([reg_t, cls_t], axis=2)

    total, d = smart_home_loss(fan, light, rec, fan_t, light_t, rec_t, **kwargs)
    total = jax.block_until_ready(total)

    refs = _reference(fan, light, rec, fan_t, light_t, rec_t)
    got = (d['fan_loss'], d['light_loss'], d['reconstruction_reg_loss'],
           d['reconstruction_cls_loss'], total)
    for g, r in zip(got, refs):
        assert jnp.allclose(g, r, atol=1e-3, rtol=1e-3), (float(g), float(r))


if __name__ == "__main__":
    key = jax.random.PRNGKey(0)
    k1, k2, k3 = jax.random.split(key, 3)
    # Small sanity case: single tile, single split (W = 64).
    _run_case(k1, B=2, S=8, C=8)
    # Non-power-of-two S with a tiny tile budget: 4 batch tiles over a 2-way
    # split -> exercises multi-step lane-wise accumulation + partial combine.
    _run_case(k2, B=32, S=12, C=8, f32_tile_budget_bytes=8 * 96 * 4)
    # Lane-aligned W = 128, 2 tiles -> one tile per split (init == finalize).
    _run_case(k3, B=16, S=16, C=8, f32_tile_budget_bytes=8 * 128 * 4)
    print("KERNEL_OK")
</pallas_src>

<mosaic_0001>
module attributes {stable_mosaic.version = 11 : i64} {
  func.func @_smart_home_loss_kernel(%arg0: i32, %arg1: i32, %arg2: memref<1x2xf32, #tpu.memory_space<vmem>>, %arg3: memref<1x2xf32, #tpu.memory_space<vmem>>, %arg4: memref<1x2xf32, #tpu.memory_space<vmem>>, %arg5: memref<1x2xf32, #tpu.memory_space<vmem>>, %arg6: memref<2x64xf32, #tpu.memory_space<vmem>>, %arg7: memref<2x64xf32, #tpu.memory_space<vmem>>, %arg8: memref<1x4xf32, #tpu.memory_space<smem>>, %arg9: memref<1x64xf32, #tpu.memory_space<vmem>>, %arg10: memref<1x64xf32, #tpu.memory_space<vmem>>, %arg11: memref<1x8xf32, #tpu.memory_space<vmem>>, %arg12: memref<2xf32, #tpu.memory_space<smem>>) attributes {dimension_semantics = [#tpu.dimension_semantics<parallel>, #tpu.dimension_semantics<arbitrary>], iteration_bounds = array<i64: 1, 1>, scalar_prefetch = 0 : i64, scratch_operands = 4 : i64, tpu.core_type = #tpu.core_type<tc>, window_params = [{pipeline_mode = #tpu.pipeline_mode<synchronous>, transform_indices = @transform_0, window_bounds = array<i64: 1, 2>}, {pipeline_mode = #tpu.pipeline_mode<synchronous>, transform_indices = @transform_1, window_bounds = array<i64: 1, 2>}, {pipeline_mode = #tpu.pipeline_mode<synchronous>, transform_indices = @transform_2, window_bounds = array<i64: 1, 2>}, {pipeline_mode = #tpu.pipeline_mode<synchronous>, transform_indices = @transform_3, window_bounds = array<i64: 1, 2>}, {transform_indices = @transform_4, window_bounds = array<i64: 2, 64>}, {transform_indices = @transform_5, window_bounds = array<i64: 2, 64>}, {transform_indices = @transform_6, window_bounds = array<i64: 1, 4>}]} {
    %c0_i32 = arith.constant 0 : i32
    %0 = arith.cmpi eq, %arg1, %c0_i32 : i32
    %1 = arith.extui %0 : i1 to i32
    %c0_i32_0 = arith.constant 0 : i32
    %2 = arith.cmpi ne, %1, %c0_i32_0 : i32
    scf.if %2 {
      %cst_37 = arith.constant 0.000000e+00 : f32
      %89 = vector.broadcast %cst_37 : f32 to vector<1x64xf32>
      %c0_38 = arith.constant 0 : index
      %c0_39 = arith.constant 0 : index
      %90 = vector.load %arg9[%c0_38, %c0_39] : memref<1x64xf32, #tpu.memory_space<vmem>>, vector<1x64xf32>
      tpu.vector_store %arg9[%c0_38, %c0_39], %89 {strides = array<i32>} : memref<1x64xf32, #tpu.memory_space<vmem>>, vector<1x64xf32>,
      %cst_40 = arith.constant 0.000000e+00 : f32
      %91 = vector.broadcast %cst_40 : f32 to vector<1x64xf32>
      %c0_41 = arith.constant 0 : index
      %c0_42 = arith.constant 0 : index
      %92 = vector.load %arg10[%c0_41, %c0_42] : memref<1x64xf32, #tpu.memory_space<vmem>>, vector<1x64xf32>
      tpu.vector_store %arg10[%c0_41, %c0_42], %91 {strides = array<i32>} : memref<1x64xf32, #tpu.memory_space<vmem>>, vector<1x64xf32>,
      %cst_43 = arith.constant 0.000000e+00 : f32
      %93 = vector.broadcast %cst_43 : f32 to vector<1x8xf32>
      %c0_44 = arith.constant 0 : index
      %c0_45 = arith.constant 0 : index
      %94 = vector.load %arg11[%c0_44, %c0_45] : memref<1x8xf32, #tpu.memory_space<vmem>>, vector<1x8xf32>
      tpu.vector_store %arg11[%c0_44, %c0_45], %93 {strides = array<i32>} : memref<1x8xf32, #tpu.memory_space<vmem>>, vector<1x8xf32>,
      %c0_46 = arith.constant 0 : index
      %c0_47 = arith.constant 0 : index
      %95 = vector.load %arg2[%c0_46, %c0_47] : memref<1x2xf32, #tpu.memory_space<vmem>>, vector<1x2xf32>
      %c0_48 = arith.constant 0 : index
      %c0_49 = arith.constant 0 : index
      %96 = vector.load %arg3[%c0_48, %c0_49] : memref<1x2xf32, #tpu.memory_space<vmem>>, vector<1x2xf32>
      %97 = arith.subf %95, %96 : vector<1x2xf32>
      %98 = math.absf %97 : vector<1x2xf32>
      %99 = vector.shape_cast %98 : vector<1x2xf32> to vector<1x1x2xf32>
      %cst_50 = arith.constant dense<0.000000e+00> : vector<1xf32>
      %100 = vector.multi_reduction <add>, %99, %cst_50 [1, 2] : vector<1x1x2xf32> to vector<1xf32>
      %101 = vector.shape_cast %100 : vector<1xf32> to vector<1x1x1xf32>
      %102 = vector.extract %101[0, 0, 0] : f32 from vector<1x1x1xf32>
      %c0_51 = arith.constant 0 : index
      %c0_52 = arith.constant 0 : index
      %103 = vector.load %arg4[%c0_51, %c0_52] : memref<1x2xf32, #tpu.memory_space<vmem>>, vector<1x2xf32>
      %c0_53 = arith.constant 0 : index
      %c0_54 = arith.constant 0 : index
      %104 = vector.load %arg5[%c0_53, %c0_54] : memref<1x2xf32, #tpu.memory_space<vmem>>, vector<1x2xf32>
      %105 = arith.subf %103, %104 : vector<1x2xf32>
      %106 = math.absf %105 : vector<1x2xf32>
      %107 = vector.shape_cast %106 : vector<1x2xf32> to vector<1x1x2xf32>
      %cst_55 = arith.constant dense<0.000000e+00> : vector<1xf32>
      %108 = vector.multi_reduction <add>, %107, %cst_55 [1, 2] : vector<1x1x2xf32> to vector<1xf32>
      %109 = vector.shape_cast %108 : vector<1xf32> to vector<1x1x1xf32>
      %110 = vector.extract %109[0, 0, 0] : f32 from vector<1x1x1xf32>
      %c0_i32_56 = arith.constant 0 : i32
      %111 = arith.cmpi eq, %arg0, %c0_i32_56 : i32
      %cst_57 = arith.constant 0.000000e+00 : f32
      %112 = arith.select %111, %102, %cst_57 : f32
      %c0_58 = arith.constant 0 : index
      %113 = memref.load %arg12[%c0_58] : memref<2xf32, #tpu.memory_space<smem>>
      memref.store %112, %arg12[%c0_58] : memref<2xf32, #tpu.memory_space<smem>>
      %cst_59 = arith.constant 0.000000e+00 : f32
      %114 = arith.select %111, %110, %cst_59 : f32
      %c1 = arith.constant 1 : index
      %115 = memref.load %arg12[%c1] : memref<2xf32, #tpu.memory_space<smem>>
      memref.store %114, %arg12[%c1] : memref<2xf32, #tpu.memory_space<smem>>
    } else {
    }
    %c0 = arith.constant 0 : index
    %c0_1 = arith.constant 0 : index
    %3 = vector.load %arg6[%c0, %c0_1] : memref<2x64xf32, #tpu.memory_space<vmem>>, vector<2x64xf32>
    %c0_2 = arith.constant 0 : index
    %c0_3 = arith.constant 0 : index
    %4 = vector.load %arg7[%c0_2, %c0_3] : memref<2x64xf32, #tpu.memory_space<vmem>>, vector<2x64xf32>
    %5 = tpu.iota {dimensions = array<i32: 1>} : vector<1x64xi32>
    %c8_i32 = arith.constant 8 : i32
    %c0_i32_4 = arith.constant 0 : i32
    %6 = arith.cmpi eq, %c8_i32, %c0_i32_4 : i32
    %c1_i32 = arith.constant 1 : i32
    %7 = arith.select %6, %c1_i32, %c8_i32 : i32
    %8 = vector.broadcast %7 : i32 to vector<1x64xi32>
    %9 = arith.remsi %5, %8 : vector<1x64xi32>
    %c0_i32_5 = arith.constant 0 : i32
    %10 = vector.broadcast %c0_i32_5 : i32 to vector<1x64xi32>
    %11 = arith.cmpi ne, %9, %10 : vector<1x64xi32>
    %c0_i32_6 = arith.constant 0 : i32
    %12 = vector.broadcast %c0_i32_6 : i32 to vector<1x64xi32>
    %13 = arith.cmpi slt, %9, %12 : vector<1x64xi32>
    %c0_i32_7 = arith.constant 0 : i32
    %14 = arith.cmpi slt, %7, %c0_i32_7 : i32
    %15 = vector.broadcast %14 : i1 to vector<1x64xi1>
    %16 = vector.broadcast %15 : vector<1x64xi1> to vector<1x64xi1>
    %17 = arith.xori %13, %16 : vector<1x64xi1>
    %18 = arith.andi %17, %11 : vector<1x64xi1>
    %19 = vector.broadcast %7 : i32 to vector<1x64xi32>
    %20 = arith.addi %9, %19 : vector<1x64xi32>
    %21 = arith.select %18, %20, %9 : vector<1x64xi1>, vector<1x64xi32>
    %c3_i32 = arith.constant 3 : i32
    %22 = vector.broadcast %c3_i32 : i32 to vector<1x64xi32>
    %23 = arith.cmpi slt, %21, %22 : vector<1x64xi32>
    %c3_i32_8 = arith.constant 3 : i32
    %24 = vector.broadcast %c3_i32_8 : i32 to vector<1x64xi32>
    %25 = arith.cmpi sge, %21, %24 : vector<1x64xi32>
    %26 = arith.subf %3, %4 : vector<2x64xf32>
    %27 = math.absf %26 : vector<2x64xf32>
    %cst = arith.constant 0.000000e+00 : f32
    %28 = vector.shape_cast %23 : vector<1x64xi1> to vector<1x64xi1>
    %29 = vector.broadcast %28 : vector<1x64xi1> to vector<2x64xi1>
    %30 = vector.broadcast %cst : f32 to vector<2x64xf32>
    %31 = arith.select %29, %27, %30 : vector<2x64xi1>, vector<2x64xf32>
    %cst_9 = arith.constant dense<0.000000e+00> : vector<64xf32>
    %32 = vector.multi_reduction <add>, %31, %cst_9 [0] : vector<2x64xf32> to vector<64xf32>
    %33 = vector.shape_cast %32 : vector<64xf32> to vector<1x64xf32>
    %cst_10 = arith.constant dense<0xFF800000> : vector<2xf32>
    %34 = vector.multi_reduction <maximumf>, %3, %cst_10 [1] : vector<2x64xf32> to vector<2xf32>
    %35 = vector.shape_cast %34 : vector<2xf32> to vector<2x1xf32>
    %36 = vector.broadcast %35 : vector<2x1xf32> to vector<2x64xf32>
    %37 = arith.subf %3, %36 : vector<2x64xf32>
    %38 = math.exp %37 : vector<2x64xf32>
    %39 = tpu.iota {dimensions = array<i32: 0>} : vector<64x8xi32>
    %c8_i32_11 = arith.constant 8 : i32
    %c0_i32_12 = arith.constant 0 : i32
    %40 = arith.cmpi eq, %c8_i32_11, %c0_i32_12 : i32
    %c1_i32_13 = arith.constant 1 : i32
    %41 = arith.select %40, %c1_i32_13, %c8_i32_11 : i32
    %42 = vector.broadcast %41 : i32 to vector<64x8xi32>
    %43 = arith.remsi %39, %42 : vector<64x8xi32>
    %c0_i32_14 = arith.constant 0 : i32
    %44 = vector.broadcast %c0_i32_14 : i32 to vector<64x8xi32>
    %45 = arith.cmpi ne, %43, %44 : vector<64x8xi32>
    %c0_i32_15 = arith.constant 0 : i32
    %46 = vector.broadcast %c0_i32_15 : i32 to vector<64x8xi32>
    %47 = arith.cmpi slt, %43, %46 : vector<64x8xi32>
    %c0_i32_16 = arith.constant 0 : i32
    %48 = arith.cmpi slt, %41, %c0_i32_16 : i32
    %49 = vector.broadcast %48 : i1 to vector<64x8xi1>
    %50 = vector.broadcast %49 : vector<64x8xi1> to vector<64x8xi1>
    %51 = arith.xori %47, %50 : vector<64x8xi1>
    %52 = arith.andi %51, %45 : vector<64x8xi1>
    %53 = vector.broadcast %41 : i32 to vector<64x8xi32>
    %54 = arith.addi %43, %53 : vector<64x8xi32>
    %55 = arith.select %52, %54, %43 : vector<64x8xi1>, vector<64x8xi32>
    %56 = tpu.iota {dimensions = array<i32: 1>} : vector<64x8xi32>
    %57 = arith.cmpi eq, %55, %56 : vector<64x8xi32>
    %58 = arith.extui %57 : vector<64x8xi1> to vector<64x8xi32>
    %59 = arith.sitofp %58 : vector<64x8xi32> to vector<64x8xf32>
    %cst_17 = arith.constant dense<0.000000e+00> : vector<2x8xf32>
    %60 = tpu.matmul %38, %59, %cst_17 {dimension_numbers = #tpu.dot_dimension_numbers<[1], [0], [0], [1], [0, 0, 1, 1], [], []>} : vector<2x64xf32>, vector<64x8xf32>, vector<2x8xf32> -> vector<2x8xf32>
    %cst_18 = arith.constant dense<0.000000e+00> : vector<2x8xf32>
    %61 = tpu.matmul %4, %59, %cst_18 {dimension_numbers = #tpu.dot_dimension_numbers<[1], [0], [0], [1], [0, 0, 1, 1], [], []>} : vector<2x64xf32>, vector<64x8xf32>, vector<2x8xf32> -> vector<2x8xf32>
    %cst_19 = arith.constant 1.000000e-30 : f32
    %62 = vector.broadcast %cst_19 : f32 to vector<2x8xf32>
    %63 = arith.maximumf %60, %62 : vector<2x8xf32>
    %64 = math.log %63 : vector<2x8xf32>
    %65 = vector.broadcast %35 : vector<2x1xf32> to vector<2x64xf32>
    %66 = arith.subf %65, %3 : vector<2x64xf32>
    %67 = arith.mulf %4, %66 : vector<2x64xf32>
    %cst_20 = arith.constant 0.000000e+00 : f32
    %68 = vector.shape_cast %25 : vector<1x64xi1> to vector<1x64xi1>
    %69 = vector.broadcast %68 : vector<1x64xi1> to vector<2x64xi1>
    %70 = vector.broadcast %cst_20 : f32 to vector<2x64xf32>
    %71 = arith.select %69, %67, %70 : vector<2x64xi1>, vector<2x64xf32>
    %cst_21 = arith.constant dense<0.000000e+00> : vector<64xf32>
    %72 = vector.multi_reduction <add>, %71, %cst_21 [0] : vector<2x64xf32> to vector<64xf32>
    %73 = vector.shape_cast %72 : vector<64xf32> to vector<1x64xf32>
    %74 = arith.mulf %64, %61 : vector<2x8xf32>
    %cst_22 = arith.constant dense<0.000000e+00> : vector<8xf32>
    %75 = vector.multi_reduction <add>, %74, %cst_22 [0] : vector<2x8xf32> to vector<8xf32>
    %76 = vector.shape_cast %75 : vector<8xf32> to vector<1x8xf32>
    %c0_23 = arith.constant 0 : index
    %c0_24 = arith.constant 0 : index
    %77 = vector.load %arg9[%c0_23, %c0_24] : memref<1x64xf32, #tpu.memory_space<vmem>>, vector<1x64xf32>
    %78 = arith.addf %77, %33 : vector<1x64xf32>
    %c0_25 = arith.constant 0 : index
    %c0_26 = arith.constant 0 : index
    %79 = vector.load %arg9[%c0_25, %c0_26] : memref<1x64xf32, #tpu.memory_space<vmem>>, vector<1x64xf32>
    tpu.vector_store %arg9[%c0_25, %c0_26], %78 {strides = array<i32>} : memref<1x64xf32, #tpu.memory_space<vmem>>, vector<1x64xf32>,
    %c0_27 = arith.constant 0 : index
    %c0_28 = arith.constant 0 : index
    %80 = vector.load %arg10[%c0_27, %c0_28] : memref<1x64xf32, #tpu.memory_space<vmem>>, vector<1x64xf32>
    %81 = arith.addf %80, %73 : vector<1x64xf32>
    %c0_29 = arith.constant 0 : index
    %c0_30 = arith.constant 0 : index
    %82 = vector.load %arg10[%c0_29, %c0_30] : memref<1x64xf32, #tpu.memory_space<vmem>>, vector<1x64xf32>
    tpu.vector_store %arg10[%c0_29, %c0_30], %81 {strides = array<i32>} : memref<1x64xf32, #tpu.memory_space<vmem>>, vector<1x64xf32>,
    %c0_31 = arith.constant 0 : index
    %c0_32 = arith.constant 0 : index
    %83 = vector.load %arg11[%c0_31, %c0_32] : memref<1x8xf32, #tpu.memory_space<vmem>>, vector<1x8xf32>
    %84 = arith.addf %83, %76 : vector<1x8xf32>
    %c0_33 = arith.constant 0 : index
    %c0_34 = arith.constant 0 : index
    %85 = vector.load %arg11[%c0_33, %c0_34] : memref<1x8xf32, #tpu.memory_space<vmem>>, vector<1x8xf32>
    tpu.vector_store %arg11[%c0_33, %c0_34], %84 {strides = array<i32>} : memref<1x8xf32, #tpu.memory_space<vmem>>, vector<1x8xf32>,
    %c0_i32_35 = arith.constant 0 : i32
    %86 = arith.cmpi eq, %arg1, %c0_i32_35 : i32
    %87 = arith.extui %86 : i1 to i32
    %c0_i32_36 = arith.constant 0 : i32
    %88 = arith.cmpi ne, %87, %c0_i32_36 : i32
    scf.if %88 {
      %89 = tpu.iota {dimensions = array<i32: 1>} : vector<1x8xi32>
      %c3_i32_37 = arith.constant 3 : i32
      %90 = vector.broadcast %c3_i32_37 : i32 to vector<1x8xi32>
      %91 = arith.cmpi sge, %89, %90 : vector<1x8xi32>
      %c0_38 = arith.constant 0 : index
      %92 = memref.load %arg12[%c0_38] : memref<2xf32, #tpu.memory_space<smem>>
      %c0_39 = arith.constant 0 : index
      %c0_40 = arith.constant 0 : index
      %93 = memref.load %arg8[%c0_39, %c0_40] : memref<1x4xf32, #tpu.memory_space<smem>>
      memref.store %92, %arg8[%c0_39, %c0_40] : memref<1x4xf32, #tpu.memory_space<smem>>
      %c1 = arith.constant 1 : index
      %94 = memref.load %arg12[%c1] : memref<2xf32, #tpu.memory_space<smem>>
      %c0_41 = arith.constant 0 : index
      %c1_42 = arith.constant 1 : index
      %95 = memref.load %arg8[%c0_41, %c1_42] : memref<1x4xf32, #tpu.memory_space<smem>>
      memref.store %94, %arg8[%c0_41, %c1_42] : memref<1x4xf32, #tpu.memory_space<smem>>
      %c0_43 = arith.constant 0 : index
      %c0_44 = arith.constant 0 : index
      %96 = vector.load %arg9[%c0_43, %c0_44] : memref<1x64xf32, #tpu.memory_space<vmem>>, vector<1x64xf32>
      %97 = vector.shape_cast %96 : vector<1x64xf32> to vector<1x1x64xf32>
      %cst_45 = arith.constant dense<0.000000e+00> : vector<1xf32>
      %98 = vector.multi_reduction <add>, %97, %cst_45 [1, 2] : vector<1x1x64xf32> to vector<1xf32>
      %99 = vector.shape_cast %98 : vector<1xf32> to vector<1x1x1xf32>
      %100 = vector.extract %99[0, 0, 0] : f32 from vector<1x1x1xf32>
      %c0_46 = arith.constant 0 : index
      %c2 = arith.constant 2 : index
      %101 = memref.load %arg8[%c0_46, %c2] : memref<1x4xf32, #tpu.memory_space<smem>>
      memref.store %100, %arg8[%c0_46, %c2] : memref<1x4xf32, #tpu.memory_space<smem>>
      %c0_47 = arith.constant 0 : index
      %c0_48 = arith.constant 0 : index
      %102 = vector.load %arg10[%c0_47, %c0_48] : memref<1x64xf32, #tpu.memory_space<vmem>>, vector<1x64xf32>
      %103 = vector.shape_cast %102 : vector<1x64xf32> to vector<1x1x64xf32>
      %cst_49 = arith.constant dense<0.000000e+00> : vector<1xf32>
      %104 = vector.multi_reduction <add>, %103, %cst_49 [1, 2] : vector<1x1x64xf32> to vector<1xf32>
      %105 = vector.shape_cast %104 : vector<1xf32> to vector<1x1x1xf32>
      %106 = vector.extract %105[0, 0, 0] : f32 from vector<1x1x1xf32>
      %c0_50 = arith.constant 0 : index
      %c0_51 = arith.constant 0 : index
      %107 = vector.load %arg11[%c0_50, %c0_51] : memref<1x8xf32, #tpu.memory_space<vmem>>, vector<1x8xf32>
      %cst_52 = arith.constant 0.000000e+00 : f32
      %108 = vector.broadcast %cst_52 : f32 to vector<1x8xf32>
      %109 = arith.select %91, %107, %108 : vector<1x8xi1>, vector<1x8xf32>
      %110 = vector.shape_cast %109 : vector<1x8xf32> to vector<1x1x8xf32>
      %cst_53 = arith.constant dense<0.000000e+00> : vector<1xf32>
      %111 = vector.multi_reduction <add>, %110, %cst_53 [1, 2] : vector<1x1x8xf32> to vector<1xf32>
      %112 = vector.shape_cast %111 : vector<1xf32> to vector<1x1x1xf32>
      %113 = vector.extract %112[0, 0, 0] : f32 from vector<1x1x1xf32>
      %114 = arith.addf %106, %113 : f32
      %c0_54 = arith.constant 0 : index
      %c3 = arith.constant 3 : index
      %115 = memref.load %arg8[%c0_54, %c3] : memref<1x4xf32, #tpu.memory_space<smem>>
      memref.store %114, %arg8[%c0_54, %c3] : memref<1x4xf32, #tpu.memory_space<smem>>
    } else {
    }
    return
  }
  func.func @transform_0(%arg0: i32, %arg1: i32) -> (i32, i32) {
    %c0_i32 = arith.constant 0 : i32
    %c0_i32_0 = arith.constant 0 : i32
    %c0_i32_1 = arith.constant 0 : i32
    return %c0_i32, %c0_i32_0 : i32, i32
  }
  func.func @transform_1(%arg0: i32, %arg1: i32) -> (i32, i32) {
    %c0_i32 = arith.constant 0 : i32
    %c0_i32_0 = arith.constant 0 : i32
    %c0_i32_1 = arith.constant 0 : i32
    return %c0_i32, %c0_i32_0 : i32, i32
  }
  func.func @transform_2(%arg0: i32, %arg1: i32) -> (i32, i32) {
    %c0_i32 = arith.constant 0 : i32
    %c0_i32_0 = arith.constant 0 : i32
    %c0_i32_1 = arith.constant 0 : i32
    return %c0_i32, %c0_i32_0 : i32, i32
  }
  func.func @transform_3(%arg0: i32, %arg1: i32) -> (i32, i32) {
    %c0_i32 = arith.constant 0 : i32
    %c0_i32_0 = arith.constant 0 : i32
    %c0_i32_1 = arith.constant 0 : i32
    return %c0_i32, %c0_i32_0 : i32, i32
  }
  func.func @transform_4(%arg0: i32, %arg1: i32) -> (i32, i32) {
    %c1_i32 = arith.constant 1 : i32
    %0 = arith.muli %arg0, %c1_i32 : i32
    %1 = arith.addi %0, %arg1 : i32
    %c0_i32 = arith.constant 0 : i32
    %c0_i32_0 = arith.constant 0 : i32
    return %1, %c0_i32 : i32, i32
  }
  func.func @transform_5(%arg0: i32, %arg1: i32) -> (i32, i32) {
    %c1_i32 = arith.constant 1 : i32
    %0 = arith.muli %arg0, %c1_i32 : i32
    %1 = arith.addi %0, %arg1 : i32
    %c0_i32 = arith.constant 0 : i32
    %c0_i32_0 = arith.constant 0 : i32
    return %1, %c0_i32 : i32, i32
  }
  func.func @transform_6(%arg0: i32, %arg1: i32) -> (i32, i32) {
    %c0_i32 = arith.constant 0 : i32
    %c0_i32_0 = arith.constant 0 : i32
    return %arg0, %c0_i32 : i32, i32
  }
}

</mosaic_0001>

<llo_original>
// kernel: tpu_custom_call.1
$region0: #{tpu_custom_call.1}
  #allocation0 [shape = 'u32[]', space=smem, size = 0x4, offset = 0x4, fixed_abs, tag = 'smem constant byte address 0x4 - core index']
  #allocation1 [shape = 'u32[144,128]{1,0:T(1,128)}', space=vmem, size = 0x12000, scoped, tag = 'internal scratch']
  #allocation2 [shape = 'f32[1,64]{1,0:T(1,128)}', space=vmem, size = 0x200, scoped, tag = 'scratch operand']
  #allocation3 [shape = 'f32[1,64]{1,0:T(1,128)}', space=vmem, size = 0x200, scoped, tag = 'scratch operand']
  #allocation4 [shape = 'f32[1,8]{1,0:T(1,128)}', space=vmem, size = 0x200, scoped, tag = 'scratch operand']
  #allocation5 [shape = 'f32[2]{0:T(128)}', space=smem, size = 0x200, scoped, tag = 'scratch operand']
  %s0 = inlined_call_operand.hbm [shape: f32[1,2], index: 0, kind: input, shape index: {}]
  %s1 = inlined_call_operand.vmem [shape: f32[1,2], index: 1, kind: input, shape index: {}]
  %s2 = inlined_call_operand.vmem [shape: f32[1,2], index: 2, kind: input, shape index: {}]
  %s3 = inlined_call_operand.vmem [shape: f32[1,2], index: 3, kind: input, shape index: {}]
  %s4 = inlined_call_operand.vmem [shape: f32[2,64], index: 4, kind: input, shape index: {}]
  %s5 = inlined_call_operand.vmem [shape: f32[2,64], index: 5, kind: input, shape index: {}]
  %s6 = inlined_call_operand.hbm [shape: f32[1,4], index: 6, kind: output, shape index: {}]
  %s7 = sld [smem:[#allocation0]]
  $region46: #{tpu_custom_call.1} parent=0
    _
  %s9 = ssub.s32 1, %s7
  %s10 = scalar_select 0, %s9, %s7
  $region1: #{tpu_custom_call.1} parent=0
    #allocation6 [shape = 'u8[512]{0}', space=vmem, size = 0x400, scoped, tag = 'input window, operand 0, single buffered']
    #allocation7 [shape = 's32[1]{0}', space=sflag, size = 0x4, scoped, tag = 'scoped memory for tpu_custom_call.1']
    #allocation8 [shape = 's32[1]{0}', space=sflag, size = 0x4, scoped, tag = 'scoped memory for tpu_custom_call.1']
    #allocation9 [shape = 'u8[512]{0}', space=smem, size = 0x200, scoped, tag = 'output window, operand 0, single buffered']
    %11 = vsyncpa [#allocation7], 0
    %12 = vsyncpa [#allocation8], 0
    // Predicated region
    $region2: #{tpu_custom_call.1} parent=1 // pred_check
      _
    $region3: #{tpu_custom_call.1} parent=1 // pred_check_branch
      %14 = sbr.rel (0) target = $region5
    $region4: #{tpu_custom_call.1} parent=1 // pred_region
      %s16 = ssub.s32 16, 16
      %17 = vsyncadd [#allocation7], %s16
      %s19 = sshll.u32 [#allocation6], 4
      %s20 = int_to_ptr.vmem [resolvable:$true] %s19
      %22 = dma.hbm_to_vmem [thread:$0]  %s0, 16, %s20, [#allocation7]
    $region5: #{tpu_custom_call.1} parent=1 // pred_fallthru
      _
    // Predicated region
    $region6: #{tpu_custom_call.1} parent=1 // pred_check
      _
    $region7: #{tpu_custom_call.1} parent=1 // pred_check_branch
      %24 = sbr.rel (0) target = $region9
    $region8: #{tpu_custom_call.1} parent=1 // pred_region
      _
    $region9: #{tpu_custom_call.1} parent=1 // pred_fallthru
      _
    // Predicated region
    $region10: #{tpu_custom_call.1} parent=1 // pred_check
      _
    $region11: #{tpu_custom_call.1} parent=1 // pred_check_branch
      %26 = sbr.rel (0) target = $region13
    $region12: #{tpu_custom_call.1} parent=1 // pred_region
      _
    $region13: #{tpu_custom_call.1} parent=1 // pred_fallthru
      _
    // Predicated region
    $region14: #{tpu_custom_call.1} parent=1 // pred_check
      _
    $region15: #{tpu_custom_call.1} parent=1 // pred_check_branch
      %28 = sbr.rel (0) target = $region17
    $region16: #{tpu_custom_call.1} parent=1 // pred_region
      _
    $region17: #{tpu_custom_call.1} parent=1 // pred_fallthru
      _
    // Predicated region
    $region18: #{tpu_custom_call.1} parent=1 // pred_check
      _
    $region19: #{tpu_custom_call.1} parent=1 // pred_check_branch
      %30 = sbr.rel (0) target = $region21
    $region20: #{tpu_custom_call.1} parent=1 // pred_region
      %s31 = sadd.s32 0, 0
      %p32 = scmp.lt.s32.totalorder %s31, 0
      %s33 = scalar_select %p32, %s31, 0
      %s34 = smul.addr %s33, 2
      %s35 = scalar_lea.vmem %s4, %s34
      %s36 = sadd.s32 0, 0
    $region21: #{tpu_custom_call.1} parent=1 // pred_fallthru
      _
    // Predicated region
    $region22: #{tpu_custom_call.1} parent=1 // pred_check
      _
    $region23: #{tpu_custom_call.1} parent=1 // pred_check_branch
      %38 = sbr.rel (0) target = $region25
    $region24: #{tpu_custom_call.1} parent=1 // pred_region
      %s39 = sadd.s32 0, 0
      %p40 = scmp.lt.s32.totalorder %s39, 0
      %s41 = scalar_select %p40, %s39, 0
      %s42 = smul.addr %s41, 2
      %s43 = scalar_lea.vmem %s5, %s42
      %s44 = sadd.s32 0, 0
    $region25: #{tpu_custom_call.1} parent=1 // pred_fallthru
      _
    // Predicated region
    $region26: #{tpu_custom_call.1} parent=1 // pred_check
      _
    $region27: #{tpu_custom_call.1} parent=1 // pred_check_branch
      %46 = sbr.rel (0) target = $region29
    $region28: #{tpu_custom_call.1} parent=1 // pred_region
      %47 = dma.done [#allocation7], 16
    $region29: #{tpu_custom_call.1} parent=1 // pred_fallthru
      _
    %s48 = sadd.s32 0, 0
    %p49 = scmp.lt.s32.totalorder %s48, 0
    %s50 = scalar_select %p49, %s48, 0
    %s51 = smul.addr %s50, 2
    %s52 = scalar_lea.vmem %s4, %s51
    %s53 = sadd.s32 0, 0
    %p54 = scmp.lt.s32.totalorder %s53, 0
    %s55 = scalar_select %p54, %s53, 0
    %s56 = smul.addr %s55, 2
    %s57 = scalar_lea.vmem %s5, %s56
    %s58 = sadd.s32 0, 0
    %p59 = scmp.lt.s32.totalorder %s58, 0
    %s60 = scalar_select %p59, %s58, 0
    %s61 = smul.addr %s60, 2
    %s62 = scalar_lea.vmem %s4, %s61
    %s63 = sadd.s32 0, 0
    %s64 = sadd.s32 0, 0
    %p65 = scmp.lt.s32.totalorder %s64, 0
    %s66 = scalar_select %p65, %s64, 0
    %s67 = smul.addr %s66, 2
    %s68 = scalar_lea.vmem %s5, %s67
    %s69 = sadd.s32 0, 0
    %p70 = scmp.eq.s32.totalorder 0, 0
    // Predicated region
    $region30: #{tpu_custom_call.1} parent=1 // pred_check
      %p71 = pneg %p70
    $region31: #{tpu_custom_call.1} parent=1 // pred_check_branch
      %73 = sbr.rel (%p71) target = $region33
    $region32: #{tpu_custom_call.1} parent=1 // pred_region
      %vm74 = vcmask 516096
      %75 = vst.msk [vmem:[#allocation2] sm:$0x1] %vm74, 0.0
      %76 = vst.msk [vmem:[#allocation3] sm:$0x1] %vm74, 0.0
      %vm77 = vcmask 57344
      %78 = vst.msk [vmem:[#allocation4] sm:$0x1] %vm77, 0.0
      %v79 = vld [vmem:[#allocation6] sm:$0x1]
      %v80 = vld [vmem:[%s1] sm:$0x1]
      %v81 = vsub.f32 %v79, %v80
      %v82 = vand.u32 2147483647, %v81
      %vm83 = vcmask 8192
      %v84 = vsel %vm83, %v82, 0.0
      %85 = vadd.xlane.f32.xlu0 %v84
      %v86 = vpop.xlane.xlu0 %85
      %v87 = vrot.slane %v86, 4
      %v88 = vadd.f32 %v86, %v87
      %v89 = vrot.slane %v88, 2
      %v90 = vadd.f32 %v88, %v89
      %v91 = vrot.slane %v90, 1
      %v92 = vadd.f32 %v90, %v91
      %s93 = vtos %v92
      %v94 = vld [vmem:[%s2] sm:$0x1]
      %v95 = vld [vmem:[%s3] sm:$0x1]
      %v96 = vsub.f32 %v94, %v95
      %v97 = vand.u32 2147483647, %v96
      %v98 = vsel %vm83, %v97, 0.0
      %99 = vadd.xlane.f32.xlu0 %v98
      %v100 = vpop.xlane.xlu0 %99
      %v101 = vrot.slane %v100, 4
      %v102 = vadd.f32 %v100, %v101
      %v103 = vrot.slane %v102, 2
      %v104 = vadd.f32 %v102, %v103
      %v105 = vrot.slane %v104, 1
      %v106 = vadd.f32 %v104, %v105
      %s107 = vtos %v106
      %p108 = scmp.eq.s32.totalorder 0, 0
      %s109 = scalar_select %p108, %s93, 0.0
      %s110 = scalar_lea.smem [#allocation5], 0
      %111 = sst [smem:[%s110]] %s109
      %s112 = scalar_select %p108, %s107, 0.0
      %s113 = scalar_lea.smem [#allocation5], 1
      %114 = sst [smem:[%s113]] %s112
    $region33: #{tpu_custom_call.1} parent=1 // pred_fallthru
      _
    %v115 = vld [vmem:[%s62] sm:$0x3]
    %v116 = vld [vmem:[%s68] sm:$0x3]
    %v117 = vlaneseq
    %v118 = vand.u32 %v117, 127
    %vm119 = vcmp.lt.s32.totalorder %v118, 0
    %v120 = vsub.s32 0, %v118
    %v121 = vsel %vm119, %v120, %v118
    %v122 = vshrl.u32 %v121, 3
    %v123 = vand.u32 %v121, 7
    %v124 = vsub.s32 0, %v123
    %v125 = vsel %vm119, %v124, %v123
    %vm126 = vcmp.ne.s32.totalorder %v125, 0
    %vm127 = vcmp.lt.s32.totalorder %v125, 0
    %vm128 = vmand %vm127, %vm126
    %v129 = vadd.s32 %v125, 8
    %v130 = vsel %vm128, %v129, %v125
    %vm131 = vcmp.lt.s32.totalorder %v130, 3
    %vm132 = vcmp.ge.s32.totalorder %v130, 3
    %v133 = vsub.f32 %v115, %v116
    %v134 = vand.u32 2147483647, %v133
    %v135 = vsel %vm131, 1, 0
    %vm136 = vcmp.eq.s32.totalorder %v135, 1
    %v137 = vsel %vm136, %v134, 0.0
    %vm138 = vcmask 517120
    %v139 = vsel %vm138, %v137, 0.0
    %v140 = vrot.slane %v139, 4
    %v141 = vadd.f32 %v139, %v140
    %v142 = vrot.slane %v141, 2
    %v143 = vadd.f32 %v141, %v142
    %v144 = vrot.slane %v143, 1
    %v145 = vadd.f32 %v143, %v144
    %v146 = vsel %vm138, %v115, -inf
    %147 = vmax.xlane.f32.xlu0 %v146
    %v148 = vpop.xlane.xlu0 %147
    %v149 = vsub.f32 %v115, %v148
    %v150 = vmul.f32 %v149, 1.442695
    %v151 = vpow.pop %v150
    %v152 = vlaneseq
    %v153 = vshrl.u32 %v152, 7
    %v154 = vadd.s32 %v153, 8
    %v155 = vadd.s32 %v153, 16
    %v156 = vadd.s32 %v153, 24
    %v157 = vadd.s32 %v153, 32
    %v158 = vadd.s32 %v153, 40
    %v159 = vadd.s32 %v153, 48
    %v160 = vadd.s32 %v153, 56
    %vm161 = vcmp.lt.s32.totalorder %v153, 0
    %v162 = vsub.s32 0, %v153
    %v163 = vsel %vm161, %v162, %v153
    %v164 = vshrl.u32 %v163, 3
    %v165 = vand.u32 %v163, 7
    %v166 = vsub.s32 0, %v165
    %v167 = vsel %vm161, %v166, %v165
    %vm168 = vcmp.lt.s32.totalorder %v154, 0
    %v169 = vsub.s32 0, %v154
    %v170 = vsel %vm168, %v169, %v154
    %v171 = vshrl.u32 %v170, 3
    %v172 = vand.u32 %v170, 7
    %v173 = vsub.s32 0, %v172
    %v174 = vsel %vm168, %v173, %v172
    %vm175 = vcmp.lt.s32.totalorder %v155, 0
    %v176 = vsub.s32 0, %v155
    %v177 = vsel %vm175, %v176, %v155
    %v178 = vshrl.u32 %v177, 3
    %v179 = vand.u32 %v177, 7
    %v180 = vsub.s32 0, %v179
    %v181 = vsel %vm175, %v180, %v179
    %vm182 = vcmp.lt.s32.totalorder %v156, 0
    %v183 = vsub.s32 0, %v156
    %v184 = vsel %vm182, %v183, %v156
    %v185 = vshrl.u32 %v184, 3
    %v186 = vand.u32 %v184, 7
    %v187 = vsub.s32 0, %v186
    %v188 = vsel %vm182, %v187, %v186
    %vm189 = vcmp.lt.s32.totalorder %v157, 0
    %v190 = vsub.s32 0, %v157
    %v191 = vsel %vm189, %v190, %v157
    %v192 = vshrl.u32 %v191, 3
    %v193 = vand.u32 %v191, 7
    %v194 = vsub.s32 0, %v193
    %v195 = vsel %vm189, %v194, %v193
    %vm196 = vcmp.lt.s32.totalorder %v158, 0
    %v197 = vsub.s32 0, %v158
    %v198 = vsel %vm196, %v197, %v158
    %v199 = vshrl.u32 %v198, 3
    %v200 = vand.u32 %v198, 7
    %v201 = vsub.s32 0, %v200
    %v202 = vsel %vm196, %v201, %v200
    %vm203 = vcmp.lt.s32.totalorder %v159, 0
    %v204 = vsub.s32 0, %v159
    %v205 = vsel %vm203, %v204, %v159
    %v206 = vshrl.u32 %v205, 3
    %v207 = vand.u32 %v205, 7
    %v208 = vsub.s32 0, %v207
    %v209 = vsel %vm203, %v208, %v207
    %vm210 = vcmp.lt.s32.totalorder %v160, 0
    %v211 = vsub.s32 0, %v160
    %v212 = vsel %vm210, %v211, %v160
    %v213 = vshrl.u32 %v212, 3
    %v214 = vand.u32 %v212, 7
    %v215 = vsub.s32 0, %v214
    %v216 = vsel %vm210, %v215, %v214
    %vm217 = vcmp.ne.s32.totalorder %v167, 0
    %vm218 = vcmp.ne.s32.totalorder %v174, 0
    %vm219 = vcmp.ne.s32.totalorder %v181, 0
    %vm220 = vcmp.ne.s32.totalorder %v188, 0
    %vm221 = vcmp.ne.s32.totalorder %v195, 0
    %vm222 = vcmp.ne.s32.totalorder %v202, 0
    %vm223 = vcmp.ne.s32.totalorder %v209, 0
    %vm224 = vcmp.ne.s32.totalorder %v216, 0
    %vm225 = vcmp.lt.s32.totalorder %v167, 0
    %vm226 = vcmp.lt.s32.totalorder %v174, 0
    %vm227 = vcmp.lt.s32.totalorder %v181, 0
    %vm228 = vcmp.lt.s32.totalorder %v188, 0
    %vm229 = vcmp.lt.s32.totalorder %v195, 0
    %vm230 = vcmp.lt.s32.totalorder %v202, 0
    %vm231 = vcmp.lt.s32.totalorder %v209, 0
    %vm232 = vcmp.lt.s32.totalorder %v216, 0
    %vm233 = vmand %vm225, %vm217
    %vm234 = vmand %vm226, %vm218
    %vm235 = vmand %vm227, %vm219
    %vm236 = vmand %vm228, %vm220
    %vm237 = vmand %vm229, %vm221
    %vm238 = vmand %vm230, %vm222
    %vm239 = vmand %vm231, %vm223
    %vm240 = vmand %vm232, %vm224
    %v241 = vadd.s32 %v167, 8
    %v242 = vadd.s32 %v174, 8
    %v243 = vadd.s32 %v181, 8
    %v244 = vadd.s32 %v188, 8
    %v245 = vadd.s32 %v195, 8
    %v246 = vadd.s32 %v202, 8
    %v247 = vadd.s32 %v209, 8
    %v248 = vadd.s32 %v216, 8
    %v249 = vsel %vm233, %v241, %v167
    %v250 = vsel %vm234, %v242, %v174
    %v251 = vsel %vm235, %v243, %v181
    %v252 = vsel %vm236, %v244, %v188
    %v253 = vsel %vm237, %v245, %v195
    %v254 = vsel %vm238, %v246, %v202
    %v255 = vsel %vm239, %v247, %v209
    %v256 = vsel %vm240, %v248, %v216
    %vm257 = vcmp.eq.s32.totalorder %v249, %v118
    %vm258 = vcmp.eq.s32.totalorder %v250, %v118
    %vm259 = vcmp.eq.s32.totalorder %v251, %v118
    %vm260 = vcmp.eq.s32.totalorder %v252, %v118
    %vm261 = vcmp.eq.s32.totalorder %v253, %v118
    %vm262 = vcmp.eq.s32.totalorder %v254, %v118
    %vm263 = vcmp.eq.s32.totalorder %v255, %v118
    %vm264 = vcmp.eq.s32.totalorder %v256, %v118
    %v265 = vsel %vm257, 1, 0
    %v266 = vsel %vm258, 1, 0
    %v267 = vsel %vm259, 1, 0
    %v268 = vsel %vm260, 1, 0
    %v269 = vsel %vm261, 1, 0
    %v270 = vsel %vm262, 1, 0
    %v271 = vsel %vm263, 1, 0
    %v272 = vsel %vm264, 1, 0
    %v273 = vcvt.s32.f32 %v265
    %v274 = vcvt.s32.f32 %v266
    %v275 = vcvt.s32.f32 %v267
    %v276 = vcvt.s32.f32 %v268
    %v277 = vcvt.s32.f32 %v269
    %v278 = vcvt.s32.f32 %v270
    %v279 = vcvt.s32.f32 %v271
    %v280 = vcvt.s32.f32 %v272
    %vm281 = vcmask 523264
    %v283 = vsel %vm281, %v151, 0
    %285 = vmatprep.subr.mxu0 0.0
    %286 = vmatpush1.msra.mxu0 %v273
    %287 = vmatprep.subr.mxu0 0.0
    %288 = vmatpush1.msra.mxu0 %v274
    %289 = vmatprep.subr.mxu0 0.0
    %290 = vmatpush1.msra.mxu0 %v275
    %291 = vmatprep.subr.mxu0 0.0
    %292 = vmatpush1.msra.mxu0 %v276
    %293 = vmatprep.subr.mxu0 0.0
    %294 = vmatpush1.msra.mxu0 %v277
    %295 = vmatprep.subr.mxu0 0.0
    %296 = vmatpush1.msra.mxu0 %v278
    %297 = vmatprep.subr.mxu0 0.0
    %298 = vmatpush1.msra.mxu0 %v279
    %299 = vmatprep.subr.mxu0 0.0
    %300 = vmatpush1.msra.mxu0 %v280
    %301 = vmatprep.subr.mxu0 0.0
    %302 = vmatpush1.msra.mxu0 0.0
    %303 = vmatprep.subr.mxu0 0.0
    %304 = vmatpush1.msra.mxu0 0.0
    %305 = vmatprep.subr.mxu0 0.0
    %306 = vmatpush1.msra.mxu0 0.0
    %307 = vmatprep.subr.mxu0 0.0
    %308 = vmatpush1.msra.mxu0 0.0
    %309 = vmatprep.subr.mxu0 0.0
    %310 = vmatpush1.msra.mxu0 0.0
    %311 = vmatprep.subr.mxu0 0.0
    %312 = vmatpush1.msra.mxu0 0.0
    %313 = vmatprep.subr.mxu0 0.0
    %314 = vmatpush1.msra.mxu0 0.0
    %315 = vmatprep.subr.mxu0 0.0
    %316 = vmatpush1.msra.mxu0 0.0
    %317 = vmatprep.subr.mxu0 0.0
    %318 = vmatpush1.msra.mxu0 0.0
    %319 = vmatprep.subr.mxu0 0.0
    %320 = vmatpush1.msra.mxu0 0.0
    %321 = vmatprep.subr.mxu0 0.0
    %322 = vmatpush1.msra.mxu0 0.0
    %323 = vmatprep.subr.mxu0 0.0
    %324 = vmatpush1.msra.mxu0 0.0
    %325 = vmatprep.subr.mxu0 0.0
    %326 = vmatpush1.msra.mxu0 0.0
    %327 = vmatprep.subr.mxu0 0.0
    %328 = vmatpush1.msra.mxu0 0.0
    %329 = vmatprep.subr.mxu0 0.0
    %330 = vmatpush1.msra.mxu0 0.0
    %331 = vmatprep.subr.mxu0 0.0
    %332 = vmatpush1.msra.mxu0 0.0
    %333 = vmatprep.subr.mxu0 0.0
    %334 = vmatpush1.msra.mxu0 0.0
    %335 = vmatprep.subr.mxu0 0.0
    %336 = vmatpush1.msra.mxu0 0.0
    %337 = vmatprep.subr.mxu0 0.0
    %338 = vmatpush1.msra.mxu0 0.0
    %339 = vmatprep.subr.mxu0 0.0
    %340 = vmatpush1.msra.mxu0 0.0
    %341 = vmatprep.subr.mxu0 0.0
    %342 = vmatpush1.msra.mxu0 0.0
    %343 = vmatprep.subr.mxu0 0.0
    %344 = vmatpush1.msra.mxu0 0.0
    %345 = vmatprep.subr.mxu0 0.0
    %346 = vmatpush1.msra.mxu0 0.0
    %347 = vmatprep.subr.mxu0 0.0
    %348 = vmatpush1.msra.mxu0 0.0
    %349 = vmatprep.mubr.f32.mxu0 0.0
    %350 = vmatmul.mubr.f32.gmra.mrb[0].mxu0 %v283
    %v351 = vpop.f32.mrb[0].mxu0
    %v352 = vadd.f32 0.0, %v351
    %v353 = vpop.f32.mrb[0].mxu0
    %354 = vdwg.mxu0
    %v356 = vsel %vm281, %v116, 0
    %358 = vmatprep.subr.mxu0 0.0
    %359 = vmatpush1.msra.mxu0 %v273
    %360 = vmatprep.subr.mxu0 0.0
    %361 = vmatpush1.msra.mxu0 %v274
    %362 = vmatprep.subr.mxu0 0.0
    %363 = vmatpush1.msra.mxu0 %v275
    %364 = vmatprep.subr.mxu0 0.0
    %365 = vmatpush1.msra.mxu0 %v276
    %366 = vmatprep.subr.mxu0 0.0
    %367 = vmatpush1.msra.mxu0 %v277
    %368 = vmatprep.subr.mxu0 0.0
    %369 = vmatpush1.msra.mxu0 %v278
    %370 = vmatprep.subr.mxu0 0.0
    %371 = vmatpush1.msra.mxu0 %v279
    %372 = vmatprep.subr.mxu0 0.0
    %373 = vmatpush1.msra.mxu0 %v280
    %374 = vmatprep.subr.mxu0 0.0
    %375 = vmatpush1.msra.mxu0 0.0
    %376 = vmatprep.subr.mxu0 0.0
    %377 = vmatpush1.msra.mxu0 0.0
    %378 = vmatprep.subr.mxu0 0.0
    %379 = vmatpush1.msra.mxu0 0.0
    %380 = vmatprep.subr.mxu0 0.0
    %381 = vmatpush1.msra.mxu0 0.0
    %382 = vmatprep.subr.mxu0 0.0
    %383 = vmatpush1.msra.mxu0 0.0
    %384 = vmatprep.subr.mxu0 0.0
    %385 = vmatpush1.msra.mxu0 0.0
    %386 = vmatprep.subr.mxu0 0.0
    %387 = vmatpush1.msra.mxu0 0.0
    %388 = vmatprep.subr.mxu0 0.0
    %389 = vmatpush1.msra.mxu0 0.0
    %390 = vmatprep.subr.mxu0 0.0
    %391 = vmatpush1.msra.mxu0 0.0
    %392 = vmatprep.subr.mxu0 0.0
    %393 = vmatpush1.msra.mxu0 0.0
    %394 = vmatprep.subr.mxu0 0.0
    %395 = vmatpush1.msra.mxu0 0.0
    %396 = vmatprep.subr.mxu0 0.0
    %397 = vmatpush1.msra.mxu0 0.0
    %398 = vmatprep.subr.mxu0 0.0
    %399 = vmatpush1.msra.mxu0 0.0
    %400 = vmatprep.subr.mxu0 0.0
    %401 = vmatpush1.msra.mxu0 0.0
    %402 = vmatprep.subr.mxu0 0.0
    %403 = vmatpush1.msra.mxu0 0.0
    %404 = vmatprep.subr.mxu0 0.0
    %405 = vmatpush1.msra.mxu0 0.0
    %406 = vmatprep.subr.mxu0 0.0
    %407 = vmatpush1.msra.mxu0 0.0
    %408 = vmatprep.subr.mxu0 0.0
    %409 = vmatpush1.msra.mxu0 0.0
    %410 = vmatprep.subr.mxu0 0.0
    %411 = vmatpush1.msra.mxu0 0.0
    %412 = vmatprep.subr.mxu0 0.0
    %413 = vmatpush1.msra.mxu0 0.0
    %414 = vmatprep.subr.mxu0 0.0
    %415 = vmatpush1.msra.mxu0 0.0
    %416 = vmatprep.subr.mxu0 0.0
    %417 = vmatpush1.msra.mxu0 0.0
    %418 = vmatprep.subr.mxu0 0.0
    %419 = vmatpush1.msra.mxu0 0.0
    %420 = vmatprep.subr.mxu0 0.0
    %421 = vmatpush1.msra.mxu0 0.0
    %422 = vmatprep.mubr.f32.mxu0 0.0
    %423 = vmatmul.mubr.f32.gmra.mrb[0].mxu0 %v356
    %v424 = vpop.f32.mrb[0].mxu0
    %v425 = vadd.f32 0.0, %v424
    %v426 = vpop.f32.mrb[0].mxu0
    %427 = vdwg.mxu0
    %v428 = vmax.f32 %v352, 1e-30
    %v429 = vlog2.pop %v428
    %v430 = vmul.f32 %v429, 0.6931472
    %v431 = vsub.f32 %v148, %v115
    %v432 = vmul.f32 %v116, %v431
    %v433 = vsel %vm132, 1, 0
    %vm434 = vcmp.eq.s32.totalorder %v433, 1
    %v435 = vsel %vm434, %v432, 0.0
    %v436 = vsel %vm138, %v435, 0.0
    %v437 = vrot.slane %v436, 4
    %v438 = vadd.f32 %v436, %v437
    %v439 = vrot.slane %v438, 2
    %v440 = vadd.f32 %v438, %v439
    %v441 = vrot.slane %v440, 1
    %v442 = vadd.f32 %v440, %v441
    %v443 = vmul.f32 %v430, %v425
    %vm444 = vcmask 58368
    %v445 = vsel %vm444, %v443, 0.0
    %v446 = vrot.slane %v445, 4
    %v447 = vadd.f32 %v445, %v446
    %v448 = vrot.slane %v447, 2
    %v449 = vadd.f32 %v447, %v448
    %v450 = vrot.slane %v449, 1
    %v451 = vadd.f32 %v449, %v450
    %v452 = vld [vmem:[#allocation2] sm:$0x1]
    %v453 = vadd.f32 %v452, %v145
    %vm454 = vcmask 516096
    %455 = vst.msk [vmem:[#allocation2] sm:$0x1] %vm454, %v453
    %v456 = vld [vmem:[#allocation3] sm:$0x1]
    %v457 = vadd.f32 %v456, %v442
    %458 = vst.msk [vmem:[#allocation3] sm:$0x1] %vm454, %v457
    %v459 = vld [vmem:[#allocation4] sm:$0x1]
    %v460 = vadd.f32 %v459, %v451
    %vm461 = vcmask 57344
    %462 = vst.msk [vmem:[#allocation4] sm:$0x1] %vm461, %v460
    // Predicated region
    $region34: #{tpu_custom_call.1} parent=1 // pred_check
      %p463 = pneg %p70
    $region35: #{tpu_custom_call.1} parent=1 // pred_check_branch
      %465 = sbr.rel (%p463) target = $region37
    $region36: #{tpu_custom_call.1} parent=1 // pred_region
      %vm466 = vcmp.ge.s32.totalorder %v118, 3
      %s467 = sld [smem:[#allocation5]]
      %s468 = scalar_lea.smem [#allocation9], 0
      %469 = sst [smem:[%s468]] %s467
      %s470 = sld [smem:[#allocation5 + $0x1]]
      %s471 = scalar_lea.smem [#allocation9], 1
      %472 = sst [smem:[%s471]] %s470
      %v473 = vld [vmem:[#allocation2] sm:$0x1]
      %v474 = vsel %vm454, %v473, 0.0
      %475 = vadd.xlane.f32.xlu0 %v474
      %v476 = vpop.xlane.xlu0 %475
      %v477 = vrot.slane %v476, 4
      %v478 = vadd.f32 %v476, %v477
      %v479 = vrot.slane %v478, 2
      %v480 = vadd.f32 %v478, %v479
      %v481 = vrot.slane %v480, 1
      %v482 = vadd.f32 %v480, %v481
      %s483 = vtos %v482
      %s484 = scalar_lea.smem [#allocation9], 2
      %485 = sst [smem:[%s484]] %s483
      %v486 = vld [vmem:[#allocation3] sm:$0x1]
      %v487 = vsel %vm454, %v486, 0.0
      %488 = vadd.xlane.f32.xlu0 %v487
      %v489 = vpop.xlane.xlu0 %488
      %v490 = vrot.slane %v489, 4
      %v491 = vadd.f32 %v489, %v490
      %v492 = vrot.slane %v491, 2
      %v493 = vadd.f32 %v491, %v492
      %v494 = vrot.slane %v493, 1
      %v495 = vadd.f32 %v493, %v494
      %s496 = vtos %v495
      %v497 = vld [vmem:[#allocation4] sm:$0x1]
      %v498 = vsel %vm466, %v497, 0.0
      %v499 = vsel %vm461, %v498, 0.0
      %500 = vadd.xlane.f32.xlu0 %v499
      %v501 = vpop.xlane.xlu0 %500
      %v502 = vrot.slane %v501, 4
      %v503 = vadd.f32 %v501, %v502
      %v504 = vrot.slane %v503, 2
      %v505 = vadd.f32 %v503, %v504
      %v506 = vrot.slane %v505, 1
      %v507 = vadd.f32 %v505, %v506
      %s508 = vtos %v507
      %s509 = sadd.f32 %s496, %s508
      %s510 = scalar_lea.smem [#allocation9], 3
      %511 = sst [smem:[%s510]] %s509
    $region37: #{tpu_custom_call.1} parent=1 // pred_fallthru
      _
    // Predicated region
    $region38: #{tpu_custom_call.1} parent=1 // pred_check
      _
    $region39: #{tpu_custom_call.1} parent=1 // pred_check_branch
      %513 = sbr.rel (0) target = $region41
    $region40: #{tpu_custom_call.1} parent=1 // pred_region
      %s515 = ssub.s32 16, 16
      %516 = vsyncadd [#allocation8], %s515
      %519 = dma.smem_to_hbm [#allocation9], 16, %s6, [#allocation8]
    $region41: #{tpu_custom_call.1} parent=1 // pred_fallthru
      _
    // Predicated region
    $region42: #{tpu_custom_call.1} parent=1 // pred_check
      _
    $region43: #{tpu_custom_call.1} parent=1 // pred_check_branch
      %521 = sbr.rel (0) target = $region45
    $region44: #{tpu_custom_call.1} parent=1 // pred_region
      %522 = dma.done [#allocation8], 16
    $region45: #{tpu_custom_call.1} parent=1 // pred_fallthru
      _
    %523 = sfence
    %524 = vsyncpa [#allocation7], 1
    %525 = vsyncpa [#allocation8], 1

</llo_original>
